<compile_context>
chip_gen: v5e
topology: v5e:2x2
jax: 0.10.0
libtpu: 0.0.40
codegen_flags: <defaults>
</compile_context>

<pallas_src>
import jax
import jax.numpy as jnp
from jax.experimental import pallas as pl
from jax.experimental.pallas import tpu as pltpu


# ---------------------------------------------------------------------------
# Helpers
# ---------------------------------------------------------------------------
def _round_up(n, m):
    return ((n + m - 1) // m) * m


def _choose_bt(B, C, HWp, itemsize, target_block_bytes=2 << 20, min_steps=4):
    """Batch-tile size: big enough per-step DMA / MXU fill, but keep >= min_steps
    grid steps so the BlockSpec pipeline (and v7x megacore) has work to overlap."""
    per = max(1, C * HWp * itemsize)
    bt = max(1, min(B, target_block_bytes // per))
    while bt > 1 and pl.cdiv(B, bt) < min_steps:
        bt //= 2
    return bt


def _vmem_limit_bytes(bt, C, HWp, x_itemsize, t_itemsize):
    block = bt * C * HWp
    est = (2 * block * x_itemsize            # x block (double-buffered)
           + 2 * block * x_itemsize          # out block (double-buffered)
           + 2 * (2 * HWp) * HWp * t_itemsize  # fused conv matrix (double-buffered)
           + 4 * block * 4)                  # in-kernel f32 temps (x slices, gate, staging)
    est = int(est * 1.5) + (1 << 20)         # headroom: SE weights, pipeline state
    # >= 32 MiB (raise v5e's 16 MiB default), <= 64 MiB (legal on v7x's physical VMEM).
    return min(max(est, 32 << 20), 64 << 20)


# ---------------------------------------------------------------------------
# Grid-invariant operand built ONCE per weight update (hoisted out of forward)
# ---------------------------------------------------------------------------
def build_flat_conv_matrix(w_sp, H, W, kernel_size, dtype=jnp.float32):
    """KxK 2->1 spatial conv rewritten as one dense matrix T (2*HWp, HWp) so that
        conv_out_flat = [smax_flat | savg_flat] @ T + bias
    reproduces Conv2d(2, 1, K, padding=K//2) exactly (cross-correlation, zero pad).
    Rows [0, HW) hold the channel-max path, rows [HWp, HWp+HW) the channel-mean path;
    both axes are zero-padded to HWp = round_up(H*W, 128) so kernel matmuls/stores
    stay lane-dense.  Pass dtype=jnp.bfloat16 to halve its VMEM footprint (v7x)."""
    K = kernel_size
    pad = K // 2
    HW = H * W
    HWp = max(128, _round_up(HW, 128))
    ri = jnp.arange(H)
    sj = jnp.arange(W)
    kh = ri[:, None] - ri[None, :] + pad                      # (H, H)  [r, i]
    kw = sj[:, None] - sj[None, :] + pad                      # (W, W)  [s, j]
    vh = (kh >= 0) & (kh < K)
    vw = (kw >= 0) & (kw < K)
    A = w_sp[:, jnp.clip(kh, 0, K - 1)[:, :, None, None],
             jnp.clip(kw, 0, K - 1)[None, None, :, :]]        # (2,H,H,W,W) [c,r,i,s,j]
    A = jnp.where(vh[None, :, :, None, None] & vw[None, None, None, :, :], A, 0.0)
    A = jnp.transpose(A, (0, 1, 3, 2, 4)).reshape(2, HW, HW)  # [c, (r,s), (i,j)]
    T = jnp.zeros((2 * HWp, HWp), jnp.float32)
    T = T.at[:HW, :HW].set(A[0])
    T = T.at[HWp:HWp + HW, :HW].set(A[1])
    return T.astype(dtype)


# ---------------------------------------------------------------------------
# Fused CBAM kernel (one grid step = Bt batch elements)
# ---------------------------------------------------------------------------
def _make_cbam_kernel(HW, HWp, C):
    inv_hw = 1.0 / HW
    inv_c = 1.0 / C
    lane_padded = HWp != HW

    def kernel(x_ref, w1_ref, w2_ref, t_ref, b_ref, out_ref):
        # x_ref:  (Bt, C, HWp)  lane-dense activations for Bt batch elements
        # w1_ref: (Cr, C)       SE conv1 weight  (Conv2d(C, C//r, 1, bias=False))
        # w2_ref: (C, Cr)       SE conv2 weight  (Conv2d(C//r, C, 1, bias=False))
        # t_ref:  (2*HWp, HWp)  fused flat spatial-conv matrix [T_max ; T_avg]
        # b_ref:  (1,)          spatial-conv bias (SMEM)
        bt = x_ref.shape[0]
        xs = [x_ref[i].astype(jnp.float32) for i in range(bt)]   # Bt x (C, HWp)

        valid = None
        if lane_padded:
            valid = jax.lax.broadcasted_iota(jnp.int32, (1, HWp), 1) < HW

        # --- channel attention: spatial max/avg pool (lane reduce) + batched SE MLP ---
        cols = []
        for xi in xs:                                             # max pools
            xm = jnp.where(valid, xi, jnp.float32(-3.0e38)) if lane_padded else xi
            cols.append(jnp.max(xm, axis=1, keepdims=True))       # (C, 1)
        for xi in xs:                                             # avg pools (pad lanes are 0)
            cols.append(jnp.sum(xi, axis=1, keepdims=True) * inv_hw)  # (C, 1)
        pooled = jnp.concatenate(cols, axis=1)                    # (C, 2*Bt)

        w1 = w1_ref[...].astype(jnp.float32)                      # (Cr, C)
        w2 = w2_ref[...].astype(jnp.float32)                      # (C, Cr)
        h = jnp.maximum(
            jnp.dot(w1, pooled, preferred_element_type=jnp.float32), 0.0)   # (Cr, 2*Bt)
        z = jnp.dot(w2, h, preferred_element_type=jnp.float32)              # (C, 2*Bt)
        ca = jax.nn.sigmoid(z[:, :bt] + z[:, bt:])                # (C, Bt) = sigmoid(se(max)+se(avg))

        # --- spatial attention: channel max/mean (sublane reduce) + ONE fused conv matmul ---
        rows = []
        for i in range(bt):
            yi = xs[i] * ca[:, i:i + 1]                           # channel-gated (C, HWp)
            rows.append(jnp.concatenate(
                [jnp.max(yi, axis=0, keepdims=True),
                 jnp.sum(yi, axis=0, keepdims=True) * inv_c], axis=1))      # (1, 2*HWp)
        stats = jnp.concatenate(rows, axis=0)                     # (Bt, 2*HWp)
        conv = jnp.dot(stats.astype(t_ref.dtype), t_ref[...],
                       preferred_element_type=jnp.float32) + b_ref[0]       # (Bt, HWp)
        sa = jax.nn.sigmoid(conv)                                 # (Bt, HWp)

        # --- epilogue: out = x * (ca*sa + 1)  (== y*sa + x), y not live at the store ---
        for i in range(bt):
            gate = ca[:, i:i + 1] * sa[i:i + 1, :] + 1.0          # (C, HWp)
            out_ref[i] = (xs[i] * gate).astype(out_ref.dtype)

    return kernel


# ---------------------------------------------------------------------------
# Wrapper
# ---------------------------------------------------------------------------
def cbam_forward(x, w1, w2, conv_mat, b_sp):
    """Fused CBAM forward.  `conv_mat` comes from build_flat_conv_matrix (built once
    per weight update, NOT per call)."""
    B, C, H, W = x.shape
    HW = H * W
    HWp = conv_mat.shape[1]
    if conv_mat.shape[0] != 2 * HWp:
        raise ValueError("conv_mat must have shape (2*HWp, HWp)")
    Cr = w1.shape[0]

    x_flat = x.reshape(B, C, HW)
    if HWp != HW:                       # lane-pad so the big store stays 128-dense
        x_flat = jnp.pad(x_flat, ((0, 0), (0, 0), (0, HWp - HW)))

    bt = _choose_bt(B, C, HWp, x.dtype.itemsize)
    Bp = pl.cdiv(B, bt) * bt
    if Bp != B:                         # pad batch so Bt divides it (zeros flow safely)
        x_flat = jnp.pad(x_flat, ((0, Bp - B), (0, 0), (0, 0)))

    kernel = _make_cbam_kernel(HW=HW, HWp=HWp, C=C)
    out_flat = pl.pallas_call(
        kernel,
        grid=(Bp // bt,),
        in_specs=[
            pl.BlockSpec((bt, C, HWp), lambda b: (b, 0, 0)),       # x: Bt batches / step
            pl.BlockSpec((Cr, C), lambda b: (0, 0)),               # SE w1 (grid-invariant)
            pl.BlockSpec((C, Cr), lambda b: (0, 0)),               # SE w2 (grid-invariant)
            pl.BlockSpec((2 * HWp, HWp), lambda b: (0, 0)),        # fused flat conv matrix
            pl.BlockSpec(memory_space=pltpu.MemorySpace.SMEM),     # conv bias
        ],
        out_specs=pl.BlockSpec((bt, C, HWp), lambda b: (b, 0, 0)),
        out_shape=jax.ShapeDtypeStruct((Bp, C, HWp), x.dtype),
        compiler_params=pltpu.CompilerParams(
            dimension_semantics=("parallel",),
            vmem_limit_bytes=_vmem_limit_bytes(
                bt, C, HWp, x.dtype.itemsize, conv_mat.dtype.itemsize),
        ),
    )(x_flat, w1, w2, conv_mat, b_sp)

    return out_flat[:B, :, :HW].reshape(B, C, H, W)


# ---------------------------------------------------------------------------
# Pure-JAX reference (correctness check only)
# ---------------------------------------------------------------------------
def cbam_reference(x, w1, w2, w_sp, b_sp, kernel_size):
    pad = kernel_size // 2
    mx = jnp.max(x, axis=(2, 3))
    av = jnp.mean(x, axis=(2, 3))

    def se(s):
        return jnp.maximum(s @ w1.T, 0.0) @ w2.T

    ca = jax.nn.sigmoid(se(mx) + se(av))[:, :, None, None]
    y = x * ca
    stats = jnp.concatenate(
        [jnp.max(y, axis=1, keepdims=True), jnp.mean(y, axis=1, keepdims=True)], axis=1)
    conv = jax.lax.conv_general_dilated(
        stats, w_sp[None], window_strides=(1, 1),
        padding=[(pad, pad), (pad, pad)],
        dimension_numbers=("NCHW", "OIHW", "NCHW")) + b_sp[0]
    sa = jax.nn.sigmoid(conv)
    return y * sa + x


if __name__ == "__main__":
    def make_inputs(B, C, H, W, reduction, K, seed):
        Cr = max(1, C // reduction)
        key = jax.random.PRNGKey(seed)
        kx, k1, k2, k3, k4 = jax.random.split(key, 5)
        x = jax.random.normal(kx, (B, C, H, W), dtype=jnp.float32)
        w1 = jax.random.normal(k1, (Cr, C), dtype=jnp.float32) * (2.0 / C) ** 0.5
        w2 = jax.random.normal(k2, (C, Cr), dtype=jnp.float32) * (2.0 / Cr) ** 0.5
        w_sp = jax.random.normal(k3, (2, K, K), dtype=jnp.float32) * 0.1
        b_sp = jax.random.normal(k4, (1,), dtype=jnp.float32) * 0.1
        return x, w1, w2, w_sp, b_sp

    fwd = jax.jit(cbam_forward)
    K = 7

    # 1) Main case: 128-aligned spatial (16x16 -> 256 lanes), Bt=2 batching, f32 matrices.
    x, w1, w2, w_sp, b_sp = make_inputs(B=8, C=32, H=16, W=16, reduction=4, K=K, seed=0)
    conv_mat = build_flat_conv_matrix(w_sp, 16, 16, K)
    out = jax.block_until_ready(fwd(x, w1, w2, conv_mat, b_sp))
    ref = cbam_reference(x, w1, w2, w_sp, b_sp, K)
    assert out.shape == x.shape and out.dtype == x.dtype
    assert jnp.allclose(out, ref, atol=2e-4, rtol=2e-4), float(jnp.max(jnp.abs(out - ref)))

    # 2) Unaligned spatial (14x14=196 -> lane-padded to 256) + batch padding (B=9 -> Bt=2).
    x, w1, w2, w_sp, b_sp = make_inputs(B=9, C=16, H=14, W=14, reduction=4, K=K, seed=1)
    conv_mat = build_flat_conv_matrix(w_sp, 14, 14, K)
    out = jax.block_until_ready(fwd(x, w1, w2, conv_mat, b_sp))
    ref = cbam_reference(x, w1, w2, w_sp, b_sp, K)
    assert jnp.allclose(out, ref, atol=2e-4, rtol=2e-4), float(jnp.max(jnp.abs(out - ref)))

    # 3) bf16 conv matrix (halves the dominant VMEM resident on v7x; f32 accumulation).
    x, w1, w2, w_sp, b_sp = make_inputs(B=8, C=32, H=16, W=16, reduction=4, K=K, seed=2)
    conv_mat = build_flat_conv_matrix(w_sp, 16, 16, K, dtype=jnp.bfloat16)
    out = jax.block_until_ready(fwd(x, w1, w2, conv_mat, b_sp))
    ref = cbam_reference(x, w1, w2, w_sp, b_sp, K)
    assert bool(jnp.all(jnp.isfinite(out)))
    assert jnp.allclose(out, ref, atol=2e-1, rtol=5e-2), float(jnp.max(jnp.abs(out - ref)))

    print("KERNEL_OK")
</pallas_src>

<mosaic_0001>
module attributes {stable_mosaic.version = 11 : i64} {
  func.func @kernel(%arg0: i32, %arg1: memref<2x32x256xf32, #tpu.memory_space<vmem>>, %arg2: memref<8x32xf32, #tpu.memory_space<vmem>>, %arg3: memref<32x8xf32, #tpu.memory_space<vmem>>, %arg4: memref<512x256xf32, #tpu.memory_space<vmem>>, %arg5: memref<1xf32, #tpu.memory_space<smem>>, %arg6: memref<2x32x256xf32, #tpu.memory_space<vmem>>) attributes {dimension_semantics = [#tpu.dimension_semantics<parallel>], iteration_bounds = array<i64: 4>, scalar_prefetch = 0 : i64, scratch_operands = 0 : i64, tpu.core_type = #tpu.core_type<tc>, window_params = [{transform_indices = @transform_0, window_bounds = array<i64: 2, 32, 256>}, {pipeline_mode = #tpu.pipeline_mode<synchronous>, transform_indices = @transform_1, window_bounds = array<i64: 8, 32>}, {pipeline_mode = #tpu.pipeline_mode<synchronous>, transform_indices = @transform_2, window_bounds = array<i64: 32, 8>}, {pipeline_mode = #tpu.pipeline_mode<synchronous>, transform_indices = @transform_3, window_bounds = array<i64: 512, 256>}, {transform_indices = @transform_4, window_bounds = array<i64: 1>}, {transform_indices = @transform_5, window_bounds = array<i64: 2, 32, 256>}]} {
    %c0 = arith.constant 0 : index
    %c0_0 = arith.constant 0 : index
    %c0_1 = arith.constant 0 : index
    %0 = vector.load %arg1[%c0, %c0_0, %c0_1] : memref<2x32x256xf32, #tpu.memory_space<vmem>>, vector<1x32x256xf32>
    %1 = vector.shape_cast %0 : vector<1x32x256xf32> to vector<32x256xf32>
    %c1 = arith.constant 1 : index
    %c0_2 = arith.constant 0 : index
    %c0_3 = arith.constant 0 : index
    %2 = vector.load %arg1[%c1, %c0_2, %c0_3] : memref<2x32x256xf32, #tpu.memory_space<vmem>>, vector<1x32x256xf32>
    %3 = vector.shape_cast %2 : vector<1x32x256xf32> to vector<32x256xf32>
    %cst = arith.constant dense<0xFF800000> : vector<32xf32>
    %4 = vector.multi_reduction <maximumf>, %1, %cst [1] : vector<32x256xf32> to vector<32xf32>
    %5 = vector.shape_cast %4 : vector<32xf32> to vector<32x1xf32>
    %cst_4 = arith.constant dense<0xFF800000> : vector<32xf32>
    %6 = vector.multi_reduction <maximumf>, %3, %cst_4 [1] : vector<32x256xf32> to vector<32xf32>
    %7 = vector.shape_cast %6 : vector<32xf32> to vector<32x1xf32>
    %cst_5 = arith.constant dense<0.000000e+00> : vector<32xf32>
    %8 = vector.multi_reduction <add>, %1, %cst_5 [1] : vector<32x256xf32> to vector<32xf32>
    %9 = vector.shape_cast %8 : vector<32xf32> to vector<32x1xf32>
    %cst_6 = arith.constant 3.906250e-03 : f32
    %10 = vector.broadcast %cst_6 : f32 to vector<32x1xf32>
    %11 = arith.mulf %9, %10 : vector<32x1xf32>
    %cst_7 = arith.constant dense<0.000000e+00> : vector<32xf32>
    %12 = vector.multi_reduction <add>, %3, %cst_7 [1] : vector<32x256xf32> to vector<32xf32>
    %13 = vector.shape_cast %12 : vector<32xf32> to vector<32x1xf32>
    %cst_8 = arith.constant 3.906250e-03 : f32
    %14 = vector.broadcast %cst_8 : f32 to vector<32x1xf32>
    %15 = arith.mulf %13, %14 : vector<32x1xf32>
    %16 = tpu.concatenate %5, %7, %11, %15 in 1 : vector<32x1xf32>, vector<32x1xf32>, vector<32x1xf32>, vector<32x1xf32> -> vector<32x4xf32>
    %c0_9 = arith.constant 0 : index
    %c0_10 = arith.constant 0 : index
    %17 = vector.load %arg2[%c0_9, %c0_10] : memref<8x32xf32, #tpu.memory_space<vmem>>, vector<8x32xf32>
    %c0_11 = arith.constant 0 : index
    %c0_12 = arith.constant 0 : index
    %18 = vector.load %arg3[%c0_11, %c0_12] : memref<32x8xf32, #tpu.memory_space<vmem>>, vector<32x8xf32>
    %cst_13 = arith.constant dense<0.000000e+00> : vector<8x4xf32>
    %19 = tpu.matmul %17, %16, %cst_13 {dimension_numbers = #tpu.dot_dimension_numbers<[1], [0], [0], [1], [0, 0, 1, 1], [], []>} : vector<8x32xf32>, vector<32x4xf32>, vector<8x4xf32> -> vector<8x4xf32>
    %cst_14 = arith.constant 0.000000e+00 : f32
    %20 = vector.broadcast %cst_14 : f32 to vector<8x4xf32>
    %21 = arith.maximumf %19, %20 : vector<8x4xf32>
    %cst_15 = arith.constant dense<0.000000e+00> : vector<32x4xf32>
    %22 = tpu.matmul %18, %21, %cst_15 {dimension_numbers = #tpu.dot_dimension_numbers<[1], [0], [0], [1], [0, 0, 1, 1], [], []>} : vector<32x8xf32>, vector<8x4xf32>, vector<32x4xf32> -> vector<32x4xf32>
    %23 = vector.extract_strided_slice %22 {offsets = [0, 0], sizes = [32, 2], strides = [1, 1]} : vector<32x4xf32> to vector<32x2xf32>
    %24 = vector.extract_strided_slice %22 {offsets = [0, 2], sizes = [32, 2], strides = [1, 1]} : vector<32x4xf32> to vector<32x2xf32>
    %25 = arith.addf %23, %24 : vector<32x2xf32>
    %26 = arith.negf %25 : vector<32x2xf32>
    %27 = math.exp %26 : vector<32x2xf32>
    %cst_16 = arith.constant 1.000000e+00 : f32
    %28 = vector.broadcast %cst_16 : f32 to vector<32x2xf32>
    %29 = arith.addf %28, %27 : vector<32x2xf32>
    %30 = arith.divf %28, %29 : vector<32x2xf32>
    %31 = vector.extract_strided_slice %30 {offsets = [0, 0], sizes = [32, 1], strides = [1, 1]} : vector<32x2xf32> to vector<32x1xf32>
    %32 = vector.broadcast %31 : vector<32x1xf32> to vector<32x256xf32>
    %33 = arith.mulf %1, %32 : vector<32x256xf32>
    %cst_17 = arith.constant dense<0xFF800000> : vector<256xf32>
    %34 = vector.multi_reduction <maximumf>, %33, %cst_17 [0] : vector<32x256xf32> to vector<256xf32>
    %35 = vector.shape_cast %34 : vector<256xf32> to vector<1x256xf32>
    %cst_18 = arith.constant dense<0.000000e+00> : vector<256xf32>
    %36 = vector.multi_reduction <add>, %33, %cst_18 [0] : vector<32x256xf32> to vector<256xf32>
    %37 = vector.shape_cast %36 : vector<256xf32> to vector<1x256xf32>
    %cst_19 = arith.constant 3.125000e-02 : f32
    %38 = vector.broadcast %cst_19 : f32 to vector<1x256xf32>
    %39 = arith.mulf %37, %38 : vector<1x256xf32>
    %40 = tpu.concatenate %35, %39 in 1 : vector<1x256xf32>, vector<1x256xf32> -> vector<1x512xf32>
    %41 = vector.extract_strided_slice %30 {offsets = [0, 1], sizes = [32, 1], strides = [1, 1]} : vector<32x2xf32> to vector<32x1xf32>
    %42 = vector.broadcast %41 : vector<32x1xf32> to vector<32x256xf32>
    %43 = arith.mulf %3, %42 : vector<32x256xf32>
    %cst_20 = arith.constant dense<0xFF800000> : vector<256xf32>
    %44 = vector.multi_reduction <maximumf>, %43, %cst_20 [0] : vector<32x256xf32> to vector<256xf32>
    %45 = vector.shape_cast %44 : vector<256xf32> to vector<1x256xf32>
    %cst_21 = arith.constant dense<0.000000e+00> : vector<256xf32>
    %46 = vector.multi_reduction <add>, %43, %cst_21 [0] : vector<32x256xf32> to vector<256xf32>
    %47 = vector.shape_cast %46 : vector<256xf32> to vector<1x256xf32>
    %cst_22 = arith.constant 3.125000e-02 : f32
    %48 = vector.broadcast %cst_22 : f32 to vector<1x256xf32>
    %49 = arith.mulf %47, %48 : vector<1x256xf32>
    %50 = tpu.concatenate %45, %49 in 1 : vector<1x256xf32>, vector<1x256xf32> -> vector<1x512xf32>
    %51 = tpu.concatenate %40, %50 in 0 : vector<1x512xf32>, vector<1x512xf32> -> vector<2x512xf32>
    %c0_23 = arith.constant 0 : index
    %c0_24 = arith.constant 0 : index
    %52 = vector.load %arg4[%c0_23, %c0_24] : memref<512x256xf32, #tpu.memory_space<vmem>>, vector<512x256xf32>
    %cst_25 = arith.constant dense<0.000000e+00> : vector<2x256xf32>
    %53 = tpu.matmul %51, %52, %cst_25 {dimension_numbers = #tpu.dot_dimension_numbers<[1], [0], [0], [1], [0, 0, 1, 1], [], []>} : vector<2x512xf32>, vector<512x256xf32>, vector<2x256xf32> -> vector<2x256xf32>
    %c0_26 = arith.constant 0 : index
    %54 = memref.load %arg5[%c0_26] : memref<1xf32, #tpu.memory_space<smem>>
    %55 = vector.broadcast %54 : f32 to vector<2x256xf32>
    %56 = arith.addf %53, %55 : vector<2x256xf32>
    %57 = arith.negf %56 : vector<2x256xf32>
    %58 = math.exp %57 : vector<2x256xf32>
    %cst_27 = arith.constant 1.000000e+00 : f32
    %59 = vector.broadcast %cst_27 : f32 to vector<2x256xf32>
    %60 = arith.addf %59, %58 : vector<2x256xf32>
    %61 = arith.divf %59, %60 : vector<2x256xf32>
    %62 = vector.extract_strided_slice %30 {offsets = [0, 0], sizes = [32, 1], strides = [1, 1]} : vector<32x2xf32> to vector<32x1xf32>
    %63 = vector.extract_strided_slice %61 {offsets = [0, 0], sizes = [1, 256], strides = [1, 1]} : vector<2x256xf32> to vector<1x256xf32>
    %64 = vector.broadcast %62 : vector<32x1xf32> to vector<32x256xf32>
    %65 = vector.broadcast %63 : vector<1x256xf32> to vector<32x256xf32>
    %66 = arith.mulf %64, %65 : vector<32x256xf32>
    %cst_28 = arith.constant 1.000000e+00 : f32
    %67 = vector.broadcast %cst_28 : f32 to vector<32x256xf32>
    %68 = arith.addf %66, %67 : vector<32x256xf32>
    %69 = arith.mulf %1, %68 : vector<32x256xf32>
    %c0_29 = arith.constant 0 : index
    %c0_30 = arith.constant 0 : index
    %c0_31 = arith.constant 0 : index
    %70 = vector.load %arg6[%c0_29, %c0_30, %c0_31] : memref<2x32x256xf32, #tpu.memory_space<vmem>>, vector<1x32x256xf32>
    %71 = vector.shape_cast %70 : vector<1x32x256xf32> to vector<32x256xf32>
    %72 = vector.shape_cast %69 : vector<32x256xf32> to vector<1x32x256xf32>
    tpu.vector_store %arg6[%c0_29, %c0_30, %c0_31], %72 {strides = array<i32>} : memref<2x32x256xf32, #tpu.memory_space<vmem>>, vector<1x32x256xf32>,
    %73 = vector.extract_strided_slice %30 {offsets = [0, 1], sizes = [32, 1], strides = [1, 1]} : vector<32x2xf32> to vector<32x1xf32>
    %74 = vector.extract_strided_slice %61 {offsets = [1, 0], sizes = [1, 256], strides = [1, 1]} : vector<2x256xf32> to vector<1x256xf32>
    %75 = vector.broadcast %73 : vector<32x1xf32> to vector<32x256xf32>
    %76 = vector.broadcast %74 : vector<1x256xf32> to vector<32x256xf32>
    %77 = arith.mulf %75, %76 : vector<32x256xf32>
    %cst_32 = arith.constant 1.000000e+00 : f32
    %78 = vector.broadcast %cst_32 : f32 to vector<32x256xf32>
    %79 = arith.addf %77, %78 : vector<32x256xf32>
    %80 = arith.mulf %3, %79 : vector<32x256xf32>
    %c1_33 = arith.constant 1 : index
    %c0_34 = arith.constant 0 : index
    %c0_35 = arith.constant 0 : index
    %81 = vector.load %arg6[%c1_33, %c0_34, %c0_35] : memref<2x32x256xf32, #tpu.memory_space<vmem>>, vector<1x32x256xf32>
    %82 = vector.shape_cast %81 : vector<1x32x256xf32> to vector<32x256xf32>
    %83 = vector.shape_cast %80 : vector<32x256xf32> to vector<1x32x256xf32>
    tpu.vector_store %arg6[%c1_33, %c0_34, %c0_35], %83 {strides = array<i32>} : memref<2x32x256xf32, #tpu.memory_space<vmem>>, vector<1x32x256xf32>,
    return
  }
  func.func @transform_0(%arg0: i32) -> (i32, i32, i32) {
    %c0_i32 = arith.constant 0 : i32
    %c0_i32_0 = arith.constant 0 : i32
    %c0_i32_1 = arith.constant 0 : i32
    return %arg0, %c0_i32, %c0_i32_0 : i32, i32, i32
  }
  func.func @transform_1(%arg0: i32) -> (i32, i32) {
    %c0_i32 = arith.constant 0 : i32
    %c0_i32_0 = arith.constant 0 : i32
    %c0_i32_1 = arith.constant 0 : i32
    return %c0_i32, %c0_i32_0 : i32, i32
  }
  func.func @transform_2(%arg0: i32) -> (i32, i32) {
    %c0_i32 = arith.constant 0 : i32
    %c0_i32_0 = arith.constant 0 : i32
    %c0_i32_1 = arith.constant 0 : i32
    return %c0_i32, %c0_i32_0 : i32, i32
  }
  func.func @transform_3(%arg0: i32) -> (i32, i32) {
    %c0_i32 = arith.constant 0 : i32
    %c0_i32_0 = arith.constant 0 : i32
    %c0_i32_1 = arith.constant 0 : i32
    return %c0_i32, %c0_i32_0 : i32, i32
  }
  func.func @transform_4(%arg0: i32) -> i32 {
    %c0_i32 = arith.constant 0 : i32
    %c0_i32_0 = arith.constant 0 : i32
    return %c0_i32 : i32
  }
  func.func @transform_5(%arg0: i32) -> (i32, i32, i32) {
    %c0_i32 = arith.constant 0 : i32
    %c0_i32_0 = arith.constant 0 : i32
    %c0_i32_1 = arith.constant 0 : i32
    return %arg0, %c0_i32, %c0_i32_0 : i32, i32, i32
  }
}

</mosaic_0001>

<llo_original>
// kernel: cbam_forward.1
$region0: #{cbam_forward.1}
  #allocation0 [shape = 'u32[]', space=smem, size = 0x4, offset = 0x4, fixed_abs, tag = 'smem constant byte address 0x4 - core index']
  #allocation1 [shape = 'u32[72,128]{1,0:T(1,128)}', space=vmem, size = 0x9000, scoped, tag = 'internal scratch']
  #allocation2 [shape = 'f32[1]{0:T(128)S(6)}', space=smem, size = 0x200, scoped, tag = 'scoped memory for cbam_forward.1']
  %s0 = inlined_call_operand.vmem [shape: f32[8,32,256], index: 0, kind: input, shape index: {}]
  %s1 = inlined_call_operand.vmem [shape: f32[8,32], index: 1, kind: input, shape index: {}]
  %s2 = inlined_call_operand.vmem [shape: f32[32,8], index: 2, kind: input, shape index: {}]
  %s3 = inlined_call_operand.vmem [shape: f32[512,256], index: 3, kind: input, shape index: {}]
  %s4 = inlined_call_operand.<no memory space> [shape: f32[1], index: 4, kind: input, shape index: {}]
  %s5 = inlined_call_operand.vmem [shape: f32[8,32,256], index: 5, kind: output, shape index: {}]
  %s6 = sld [smem:[#allocation0]]
  $region53: #{cbam_forward.1} parent=0
    _
  %s8 = ssub.s32 1, %s6
  %s9 = scalar_select 0, %s8, %s6
  %10 = sst [smem:[#allocation2]] %s4
  loop: start=0, step=1, limit=6
  $region2: #{cbam_forward.1} parent=0 // loop_pre_header
    _
  $region3: #{cbam_forward.1} parent=0 // loop_header
    %s12 = sphi 0, %s16
    %p13 = scmp.ge.s32.totalorder %s12, 6
    %s22 = sphi 0, %s24
    %s25 = sphi 0, %s22
    %s26 = sphi 0, %s25
    %s42 = sphi 0, %s26
    %s46 = sphi 0, %s46
    %s48 = sphi 0, %s46
    %s49 = sphi 0, %s48
    %s63 = sphi 0, %s49
    %s67 = sphi 0, %s67
    %s69 = sphi 0, %s67
    %s70 = sphi 0, %s69
    %s84 = sphi 0, %s70
    %s88 = sphi 0, %s88
    %s90 = sphi 0, %s88
    %s91 = sphi 0, %s90
    %s105 = sphi 0, %s91
    %s109 = sphi 0, %s109
    %s111 = sphi 0, %s109
    %s112 = sphi 0, %s111
    %s126 = sphi 0, %s112
    %s132 = sphi 0, %s134
    %s135 = sphi 0, %s132
    %s136 = sphi 0, %s135
    %s152 = sphi 0, %s136
  $region4: #{cbam_forward.1} parent=0 // loop_header_branch
    %15 = sbr.rel (%p13) target = $region8
  $region5: #{cbam_forward.1} parent=0 // loop_body
    %s17 = ssub.s32 %s12, 1
    %s18 = ssub.s32 %s12, 2
    %s19 = sadd.s32 %s12, 1
    %s20 = ssub.s32 %s12, %s19
    %p21 = scmp.eq.s32.totalorder %s20, 0
    %s23 = sadd.s32 %s22, 1
    %s24 = scalar_select %p21, %s22, %s23
    %p27 = pneg %p21
    %p28 = scmp.eq.s32.totalorder %s12, 3
    %p29 = por %p27, %p28
    %p30 = scmp.ne.s32.totalorder %s22, %s25
    %p31 = scmp.eq.s32.totalorder %s12, 0
    %p32 = por %p30, %p31
    %p33 = scmp.ne.s32.totalorder %s22, %s25
    %p34 = scmp.eq.s32.totalorder %s17, 3
    %p35 = por %p33, %p34
    %p36 = scmp.ne.s32.totalorder %s25, %s26
    %p37 = scmp.eq.s32.totalorder %s17, 0
    %p38 = por %p36, %p37
    %p39 = scmp.ne.s32.totalorder %s25, %s26
    %p40 = scmp.eq.s32.totalorder %s18, 3
    %p41 = por %p39, %p40
    %p43 = scmp.ne.s32.totalorder %s26, %s42
    %p44 = scmp.eq.s32.totalorder %s18, 0
    %p45 = por %p43, %p44
    %s47 = sadd.s32 %s46, 1
    %p50 = scmp.eq.s32.totalorder %s12, 3
    %p51 = scmp.ne.s32.totalorder %s46, %s48
    %p52 = scmp.eq.s32.totalorder %s12, 0
    %p53 = por %p51, %p52
    %p54 = scmp.ne.s32.totalorder %s46, %s48
    %p55 = scmp.eq.s32.totalorder %s17, 3
    %p56 = por %p54, %p55
    %p57 = scmp.ne.s32.totalorder %s48, %s49
    %p58 = scmp.eq.s32.totalorder %s17, 0
    %p59 = por %p57, %p58
    %p60 = scmp.ne.s32.totalorder %s48, %s49
    %p61 = scmp.eq.s32.totalorder %s18, 3
    %p62 = por %p60, %p61
    %p64 = scmp.ne.s32.totalorder %s49, %s63
    %p65 = scmp.eq.s32.totalorder %s18, 0
    %p66 = por %p64, %p65
    %s68 = sadd.s32 %s67, 1
    %p71 = scmp.eq.s32.totalorder %s12, 3
    %p72 = scmp.ne.s32.totalorder %s67, %s69
    %p73 = scmp.eq.s32.totalorder %s12, 0
    %p74 = por %p72, %p73
    %p75 = scmp.ne.s32.totalorder %s67, %s69
    %p76 = scmp.eq.s32.totalorder %s17, 3
    %p77 = por %p75, %p76
    %p78 = scmp.ne.s32.totalorder %s69, %s70
    %p79 = scmp.eq.s32.totalorder %s17, 0
    %p80 = por %p78, %p79
    %p81 = scmp.ne.s32.totalorder %s69, %s70
    %p82 = scmp.eq.s32.totalorder %s18, 3
    %p83 = por %p81, %p82
    %p85 = scmp.ne.s32.totalorder %s70, %s84
    %p86 = scmp.eq.s32.totalorder %s18, 0
    %p87 = por %p85, %p86
    %s89 = sadd.s32 %s88, 1
    %p92 = scmp.eq.s32.totalorder %s12, 3
    %p93 = scmp.ne.s32.totalorder %s88, %s90
    %p94 = scmp.eq.s32.totalorder %s12, 0
    %p95 = por %p93, %p94
    %p96 = scmp.ne.s32.totalorder %s88, %s90
    %p97 = scmp.eq.s32.totalorder %s17, 3
    %p98 = por %p96, %p97
    %p99 = scmp.ne.s32.totalorder %s90, %s91
    %p100 = scmp.eq.s32.totalorder %s17, 0
    %p101 = por %p99, %p100
    %p102 = scmp.ne.s32.totalorder %s90, %s91
    %p103 = scmp.eq.s32.totalorder %s18, 3
    %p104 = por %p102, %p103
    %p106 = scmp.ne.s32.totalorder %s91, %s105
    %p107 = scmp.eq.s32.totalorder %s18, 0
    %p108 = por %p106, %p107
    %s110 = sadd.s32 %s109, 1
    %p113 = scmp.eq.s32.totalorder %s12, 3
    %p114 = scmp.ne.s32.totalorder %s109, %s111
    %p115 = scmp.eq.s32.totalorder %s12, 0
    %p116 = por %p114, %p115
    %p117 = scmp.ne.s32.totalorder %s109, %s111
    %p118 = scmp.eq.s32.totalorder %s17, 3
    %p119 = por %p117, %p118
    %p120 = scmp.ne.s32.totalorder %s111, %s112
    %p121 = scmp.eq.s32.totalorder %s17, 0
    %p122 = por %p120, %p121
    %p123 = scmp.ne.s32.totalorder %s111, %s112
    %p124 = scmp.eq.s32.totalorder %s18, 3
    %p125 = por %p123, %p124
    %p127 = scmp.ne.s32.totalorder %s112, %s126
    %p128 = scmp.eq.s32.totalorder %s18, 0
    %p129 = por %p127, %p128
    %s130 = ssub.s32 %s12, %s19
    %p131 = scmp.eq.s32.totalorder %s130, 0
    %s133 = sadd.s32 %s132, 1
    %s134 = scalar_select %p131, %s132, %s133
    %p137 = pneg %p131
    %p138 = scmp.eq.s32.totalorder %s12, 3
    %p139 = por %p137, %p138
    %p140 = scmp.ne.s32.totalorder %s132, %s135
    %p141 = scmp.eq.s32.totalorder %s12, 0
    %p142 = por %p140, %p141
    %p143 = scmp.ne.s32.totalorder %s132, %s135
    %p144 = scmp.eq.s32.totalorder %s17, 3
    %p145 = por %p143, %p144
    %p146 = scmp.ne.s32.totalorder %s135, %s136
    %p147 = scmp.eq.s32.totalorder %s17, 0
    %p148 = por %p146, %p147
    %p149 = scmp.ne.s32.totalorder %s135, %s136
    %p150 = scmp.eq.s32.totalorder %s18, 3
    %p151 = por %p149, %p150
    %p153 = scmp.ne.s32.totalorder %s136, %s152
    %p154 = scmp.eq.s32.totalorder %s18, 0
    %p155 = por %p153, %p154
    %p156 = scmp.le.s32.totalorder 1, %s12
    %p157 = scmp.lt.s32.totalorder %s12, 5
    %p158 = pnand %p156, %p157
    %p159 = pneg %p158
    // Predicated region
    $region9: #{cbam_forward.1} parent=5 // pred_check
      _
    $region10: #{cbam_forward.1} parent=5 // pred_check_branch
      %161 = sbr.rel (%p158) target = $region12
    $region11: #{cbam_forward.1} parent=5 // pred_region
      %s162 = ssub.s32 %s12, 1
      // Predicated region
      $region13: #{cbam_forward.1} parent=11 // pred_check
        %p163 = pneg %p59
      $region14: #{cbam_forward.1} parent=11 // pred_check_branch
        %165 = sbr.rel (%p163) target = $region16
      $region15: #{cbam_forward.1} parent=11 // pred_region
        _
      $region16: #{cbam_forward.1} parent=11 // pred_fallthru
        _
      // Predicated region
      $region17: #{cbam_forward.1} parent=11 // pred_check
        %p166 = pneg %p80
      $region18: #{cbam_forward.1} parent=11 // pred_check_branch
        %168 = sbr.rel (%p166) target = $region20
      $region19: #{cbam_forward.1} parent=11 // pred_region
        _
      $region20: #{cbam_forward.1} parent=11 // pred_fallthru
        _
      // Predicated region
      $region21: #{cbam_forward.1} parent=11 // pred_check
        %p169 = pneg %p101
      $region22: #{cbam_forward.1} parent=11 // pred_check_branch
        %171 = sbr.rel (%p169) target = $region24
      $region23: #{cbam_forward.1} parent=11 // pred_region
        _
      $region24: #{cbam_forward.1} parent=11 // pred_fallthru
        _
      // Predicated region
      $region25: #{cbam_forward.1} parent=11 // pred_check
        %p172 = pneg %p122
      $region26: #{cbam_forward.1} parent=11 // pred_check_branch
        %174 = sbr.rel (%p172) target = $region28
      $region27: #{cbam_forward.1} parent=11 // pred_region
        _
      $region28: #{cbam_forward.1} parent=11 // pred_fallthru
        _
    $region12: #{cbam_forward.1} parent=5 // pred_fallthru
      _
    %p175 = scmp.lt.s32.totalorder %s12, 4
    // Predicated region
    $region29: #{cbam_forward.1} parent=5 // pred_check
      %p176 = pneg %p175
    $region30: #{cbam_forward.1} parent=5 // pred_check_branch
      %178 = sbr.rel (%p176) target = $region32
    $region31: #{cbam_forward.1} parent=5 // pred_region
      // Predicated region
      $region33: #{cbam_forward.1} parent=31 // pred_check
        %p179 = pneg %p32
      $region34: #{cbam_forward.1} parent=31 // pred_check_branch
        %181 = sbr.rel (%p179) target = $region36
      $region35: #{cbam_forward.1} parent=31 // pred_region
        %s182 = smul.u32 2, %s12
        %p183 = scmp.lt.s32.totalorder %s182, 7
        %s184 = scalar_select %p183, %s182, 7
        %s185 = smul.addr %s184, 8
        %s186 = smul.addr %s185, 8
        %s187 = scalar_lea.vmem %s0, %s186
        %s188 = smul.u32 2, %s12
      $region36: #{cbam_forward.1} parent=31 // pred_fallthru
        _
    $region32: #{cbam_forward.1} parent=5 // pred_fallthru
      _
    %p189 = scmp.le.s32.totalorder 1, %s12
    %p190 = scmp.lt.s32.totalorder %s12, 5
    %p191 = pnand %p189, %p190
    %p192 = pneg %p191
    // Predicated region
    $region37: #{cbam_forward.1} parent=5 // pred_check
      _
    $region38: #{cbam_forward.1} parent=5 // pred_check_branch
      %194 = sbr.rel (%p191) target = $region40
    $region39: #{cbam_forward.1} parent=5 // pred_region
      %s195 = ssub.s32 %s12, 1
      %s196 = smul.u32 2, %s17
      %p197 = scmp.lt.s32.totalorder %s196, 7
      %s198 = scalar_select %p197, %s196, 7
      %s199 = smul.addr %s198, 8
      %s200 = smul.addr %s199, 8
      %s201 = scalar_lea.vmem %s0, %s200
      %p202 = pneg %p38
      %p203 = pneg %p35
      %p204 = pneg %p59
      %p205 = pneg %p56
      %p206 = pneg %p80
      %p207 = pneg %p77
      %p208 = pneg %p101
      %p209 = pneg %p98
      %p210 = pneg %p122
      %p211 = pneg %p119
      %p212 = pneg %p148
      %p213 = pneg %p145
      %s214 = smul.u32 2, %s17
      %p215 = scmp.lt.s32.totalorder %s214, 7
      %s216 = scalar_select %p215, %s214, 7
      %s217 = smul.addr %s216, 8
      %s218 = smul.addr %s217, 8
      %s219 = scalar_lea.vmem %s5, %s218
      %s220 = smul.u32 2, %s17
      %p221 = scmp.lt.s32.totalorder %s220, 7
      %s222 = scalar_select %p221, %s220, 7
      %s223 = smul.addr %s222, 8
      %s224 = smul.addr %s223, 8
      %s225 = scalar_lea.vmem %s0, %s224
      %s226 = smul.u32 2, %s17
      %s227 = smul.u32 2, %s17
      %p228 = scmp.lt.s32.totalorder %s227, 7
      %s229 = scalar_select %p228, %s227, 7
      %s230 = smul.addr %s229, 8
      %s231 = smul.addr %s230, 8
      %s232 = scalar_lea.vmem %s5, %s231
      %s233 = smul.u32 2, %s17
      %v234 = vld [vmem:[%s225] sm:$0xff]
      %v235 = vld [vmem:[%s225 + $0x8] sm:$0xff]
      %v236 = vld [vmem:[%s225 + $0x10] sm:$0xff]
      %v237 = vld [vmem:[%s225 + $0x18] sm:$0xff]
      %v238 = vld [vmem:[%s225 + $0x20] sm:$0xff]
      %v239 = vld [vmem:[%s225 + $0x28] sm:$0xff]
      %v240 = vld [vmem:[%s225 + $0x30] sm:$0xff]
      %v241 = vld [vmem:[%s225 + $0x38] sm:$0xff]
      %s242 = scalar_lea.vmem %s225, 64
      %v243 = vld [vmem:[%s242] sm:$0xff]
      %v244 = vld [vmem:[%s242 + $0x8] sm:$0xff]
      %v245 = vld [vmem:[%s242 + $0x10] sm:$0xff]
      %v246 = vld [vmem:[%s242 + $0x18] sm:$0xff]
      %v247 = vld [vmem:[%s242 + $0x20] sm:$0xff]
      %v248 = vld [vmem:[%s242 + $0x28] sm:$0xff]
      %v249 = vld [vmem:[%s242 + $0x30] sm:$0xff]
      %v250 = vld [vmem:[%s242 + $0x38] sm:$0xff]
      %v251 = vmax.f32 %v234, %v235
      %252 = vmax.xlane.f32.xlu0 %v251
      %v253 = vpop.xlane.xlu0 %252
      %v254 = vmax.f32 %v236, %v237
      %255 = vmax.xlane.f32.xlu0 %v254
      %v256 = vpop.xlane.xlu0 %255
      %v257 = vmax.f32 %v238, %v239
      %258 = vmax.xlane.f32.xlu0 %v257
      %v259 = vpop.xlane.xlu0 %258
      %v260 = vmax.f32 %v240, %v241
      %261 = vmax.xlane.f32.xlu0 %v260
      %v262 = vpop.xlane.xlu0 %261
      %v263 = vmax.f32 %v243, %v244
      %264 = vmax.xlane.f32.xlu0 %v263
      %v265 = vpop.xlane.xlu0 %264
      %v266 = vmax.f32 %v245, %v246
      %267 = vmax.xlane.f32.xlu0 %v266
      %v268 = vpop.xlane.xlu0 %267
      %v269 = vmax.f32 %v247, %v248
      %270 = vmax.xlane.f32.xlu0 %v269
      %v271 = vpop.xlane.xlu0 %270
      %v272 = vmax.f32 %v249, %v250
      %273 = vmax.xlane.f32.xlu0 %v272
      %v274 = vpop.xlane.xlu0 %273
      %v275 = vadd.f32 %v234, %v235
      %276 = vadd.xlane.f32.xlu0 %v275
      %v277 = vpop.xlane.xlu0 %276
      %v278 = vadd.f32 %v236, %v237
      %279 = vadd.xlane.f32.xlu0 %v278
      %v280 = vpop.xlane.xlu0 %279
      %v281 = vadd.f32 %v238, %v239
      %282 = vadd.xlane.f32.xlu0 %v281
      %v283 = vpop.xlane.xlu0 %282
      %v284 = vadd.f32 %v240, %v241
      %285 = vadd.xlane.f32.xlu0 %v284
      %v286 = vpop.xlane.xlu0 %285
      %v287 = vmul.f32 %v277, 0.00390625
      %v288 = vmul.f32 %v280, 0.00390625
      %v289 = vmul.f32 %v283, 0.00390625
      %v290 = vmul.f32 %v286, 0.00390625
      %v291 = vadd.f32 %v243, %v244
      %292 = vadd.xlane.f32.xlu0 %v291
      %v293 = vpop.xlane.xlu0 %292
      %v294 = vadd.f32 %v245, %v246
      %295 = vadd.xlane.f32.xlu0 %v294
      %v296 = vpop.xlane.xlu0 %295
      %v297 = vadd.f32 %v247, %v248
      %298 = vadd.xlane.f32.xlu0 %v297
      %v299 = vpop.xlane.xlu0 %298
      %v300 = vadd.f32 %v249, %v250
      %301 = vadd.xlane.f32.xlu0 %v300
      %v302 = vpop.xlane.xlu0 %301
      %v303 = vmul.f32 %v293, 0.00390625
      %v304 = vmul.f32 %v296, 0.00390625
      %v305 = vmul.f32 %v299, 0.00390625
      %v306 = vmul.f32 %v302, 0.00390625
      %vm307 = vcmask 7168
      %v308 = vsel %vm307, %v253, %v265
      %v309 = vsel %vm307, %v256, %v268
      %v310 = vsel %vm307, %v259, %v271
      %v311 = vsel %vm307, %v262, %v274
      %vm312 = vcmask 15360
      %v313 = vsel %vm312, %v308, %v287
      %v314 = vsel %vm312, %v309, %v288
      %v315 = vsel %vm312, %v310, %v289
      %v316 = vsel %vm312, %v311, %v290
      %vm317 = vcmask 23552
      %v318 = vsel %vm317, %v313, %v303
      %v319 = vsel %vm317, %v314, %v304
      %v320 = vsel %vm317, %v315, %v305
      %v321 = vsel %vm317, %v316, %v306
      %v322 = vld [vmem:[%s1] sm:$0xff]
      %v323 = vld [vmem:[%s2] sm:$0xff]
      %v324 = vld [vmem:[%s2 + $0x8] sm:$0xff]
      %v325 = vld [vmem:[%s2 + $0x10] sm:$0xff]
      %v326 = vld [vmem:[%s2 + $0x18] sm:$0xff]
      %vm327 = vcmask 261120
      %v329 = vsel %vm327, %v322, 0
      %331 = vmatpush.msra.mxu0 0.0
      %332 = vmatpush.msra.mxu0 0.0
      %333 = vmatpush.msra.mxu0 0.0
      %334 = vmatpush.msra.mxu0 0.0
      %335 = vmatpush.msra.mxu0 0.0
      %336 = vmatpush.msra.mxu0 0.0
      %337 = vmatpush.msra.mxu0 0.0
      %338 = vmatpush.msra.mxu0 0.0
      %339 = vmatpush.msra.mxu0 0.0
      %340 = vmatpush.msra.mxu0 0.0
      %341 = vmatpush.msra.mxu0 0.0
      %342 = vmatpush.msra.mxu0 0.0
      %343 = vmatpush.msra.mxu0 %v321
      %344 = vmatpush.msra.mxu0 %v320
      %345 = vmatpush.msra.mxu0 %v319
      %346 = vmatpush.msra.mxu0 %v318
      %347 = vmatmul.f32.gmra.mxu0 %v329
      %v348 = vpop.f32.mrf.mxu0
      %v349 = vadd.f32 0.0, %v348
      %350 = vdwg.mxu0
      %v351 = vmax.f32 %v349, 0.0
      %vm352 = vcmask 64512
      %v354 = vsel %vm352, %v323, 0
      %v357 = vsel %vm352, %v324, 0
      %v360 = vsel %vm352, %v325, 0
      %v363 = vsel %vm352, %v326, 0
      %365 = vmatpush.msra.mxu0 0.0
      %366 = vmatpush.msra.mxu0 0.0
      %367 = vmatpush.msra.mxu0 0.0
      %368 = vmatpush.msra.mxu0 0.0
      %369 = vmatpush.msra.mxu0 0.0
      %370 = vmatpush.msra.mxu0 0.0
      %371 = vmatpush.msra.mxu0 0.0
      %372 = vmatpush.msra.mxu0 0.0
      %373 = vmatpush.msra.mxu0 0.0
      %374 = vmatpush.msra.mxu0 0.0
      %375 = vmatpush.msra.mxu0 0.0
      %376 = vmatpush.msra.mxu0 0.0
      %377 = vmatpush.msra.mxu0 0.0
      %378 = vmatpush.msra.mxu0 0.0
      %379 = vmatpush.msra.mxu0 0.0
      %380 = vmatpush.msra.mxu0 %v351
      %381 = vmatmul.f32.gmra.mxu0 %v354
      %v382 = vpop.f32.mrf.mxu0
      %v383 = vadd.f32 0.0, %v382
      %384 = vmatmul.f32.gmra.mxu0 %v357
      %v385 = vpop.f32.mrf.mxu0
      %v386 = vadd.f32 0.0, %v385
      %387 = vmatmul.f32.gmra.mxu0 %v360
      %v388 = vpop.f32.mrf.mxu0
      %v389 = vadd.f32 0.0, %v388
      %390 = vmatmul.f32.gmra.mxu0 %v363
      %v391 = vpop.f32.mrf.mxu0
      %v392 = vadd.f32 0.0, %v391
      %393 = vdwg.mxu0
      %398 = vrot.lane.b32.xlu0 %v383, 126
      %v399 = vpop.permute.xlu0 %398
      %400 = vrot.lane.b32.xlu0 %v386, 126
      %v401 = vpop.permute.xlu0 %400
      %402 = vrot.lane.b32.xlu0 %v389, 126
      %v403 = vpop.permute.xlu0 %402
      %404 = vrot.lane.b32.xlu0 %v392, 126
      %v405 = vpop.permute.xlu0 %404
      %v410 = vadd.f32 %v383, %v399
      %v411 = vadd.f32 %v386, %v401
      %v412 = vadd.f32 %v389, %v403
      %v413 = vadd.f32 %v392, %v405
      %v414 = vxor.u32 %v410, 2147483648
      %v415 = vxor.u32 %v411, 2147483648
      %v416 = vxor.u32 %v412, 2147483648
      %v417 = vxor.u32 %v413, 2147483648
      %v418 = vmul.f32 %v414, 1.442695
      %v419 = vpow.pop %v418
      %v420 = vmul.f32 %v415, 1.442695
      %v421 = vpow.pop %v420
      %v422 = vmul.f32 %v416, 1.442695
      %v423 = vpow.pop %v422
      %v424 = vmul.f32 %v417, 1.442695
      %v425 = vpow.pop %v424
      %v426 = vadd.f32 %v419, 1.0
      %v427 = vadd.f32 %v421, 1.0
      %v428 = vadd.f32 %v423, 1.0
      %v429 = vadd.f32 %v425, 1.0
      %v430 = vrcp.pop %v426
      %v431 = vmul.f32 %v426, %v430
      %v432 = vsub.f32 1.0, %v431
      %v433 = vmul.f32 %v430, %v432
      %v434 = vadd.f32 %v430, %v433
      %vm435 = vweird.f32 %v426
      %vm436 = vweird.f32 %v430
      %vm437 = vmor %vm435, %vm436
      %v438 = vsel %vm437, %v430, %v434
      %v439 = vand.u32 2147483647, %v426
      %vm440 = vcmp.eq.f32.partialorder %v439, 8.507059e+37
      %v441 = vand.u32 %v426, 2147483648
      %v442 = vor.u32 1.1754944e-38, %v441
      %v443 = vsel %vm440, %v442, %v438
      %v444 = vmul.f32 1.0, %v443
      %v445 = vrcp.pop %v427
      %v446 = vmul.f32 %v427, %v445
      %v447 = vsub.f32 1.0, %v446
      %v448 = vmul.f32 %v445, %v447
      %v449 = vadd.f32 %v445, %v448
      %vm450 = vweird.f32 %v427
      %vm451 = vweird.f32 %v445
      %vm452 = vmor %vm450, %vm451
      %v453 = vsel %vm452, %v445, %v449
      %v454 = vand.u32 2147483647, %v427
      %vm455 = vcmp.eq.f32.partialorder %v454, 8.507059e+37
      %v456 = vand.u32 %v427, 2147483648
      %v457 = vor.u32 1.1754944e-38, %v456
      %v458 = vsel %vm455, %v457, %v453
      %v459 = vmul.f32 1.0, %v458
      %v460 = vrcp.pop %v428
      %v461 = vmul.f32 %v428, %v460
      %v462 = vsub.f32 1.0, %v461
      %v463 = vmul.f32 %v460, %v462
      %v464 = vadd.f32 %v460, %v463
      %vm465 = vweird.f32 %v428
      %vm466 = vweird.f32 %v460
      %vm467 = vmor %vm465, %vm466
      %v468 = vsel %vm467, %v460, %v464
      %v469 = vand.u32 2147483647, %v428
      %vm470 = vcmp.eq.f32.partialorder %v469, 8.507059e+37
      %v471 = vand.u32 %v428, 2147483648
      %v472 = vor.u32 1.1754944e-38, %v471
      %v473 = vsel %vm470, %v472, %v468
      %v474 = vmul.f32 1.0, %v473
      %v475 = vrcp.pop %v429
      %v476 = vmul.f32 %v429, %v475
      %v477 = vsub.f32 1.0, %v476
      %v478 = vmul.f32 %v475, %v477
      %v479 = vadd.f32 %v475, %v478
      %vm480 = vweird.f32 %v429
      %vm481 = vweird.f32 %v475
      %vm482 = vmor %vm480, %vm481
      %v483 = vsel %vm482, %v475, %v479
      %v484 = vand.u32 2147483647, %v429
      %vm485 = vcmp.eq.f32.partialorder %v484, 8.507059e+37
      %v486 = vand.u32 %v429, 2147483648
      %v487 = vor.u32 1.1754944e-38, %v486
      %v488 = vsel %vm485, %v487, %v483
      %v489 = vmul.f32 1.0, %v488
      %491 = vset.pattern.permute.xlu0 0
      %492 = vperm.xlu0 %491, %v444
      %v493 = vpop.permute.xlu0 %492
      %496 = vset.pattern.permute.xlu0 0
      %497 = vperm.xlu0 %496, %v459
      %v498 = vpop.permute.xlu0 %497
      %501 = vset.pattern.permute.xlu0 0
      %502 = vperm.xlu0 %501, %v474
      %v503 = vpop.permute.xlu0 %502
      %506 = vset.pattern.permute.xlu0 0
      %507 = vperm.xlu0 %506, %v489
      %v508 = vpop.permute.xlu0 %507
      %v510 = vmul.f32 %v234, %v493
      %v511 = vmul.f32 %v235, %v493
      %v512 = vmul.f32 %v236, %v498
      %v513 = vmul.f32 %v237, %v498
      %v514 = vmul.f32 %v238, %v503
      %v515 = vmul.f32 %v239, %v503
      %v516 = vmul.f32 %v240, %v508
      %v517 = vmul.f32 %v241, %v508
      %v518 = vmax.f32 %v510, %v514
      %v519 = vmax.f32 %v512, %v516
      %v520 = vmax.f32 %v518, %v519
      %v521 = vrot.slane %v520, 4
      %v522 = vmax.f32 %v520, %v521
      %v523 = vrot.slane %v522, 2
      %v524 = vmax.f32 %v522, %v523
      %v525 = vrot.slane %v524, 1
      %v526 = vmax.f32 %v524, %v525
      %v527 = vmax.f32 %v511, %v515
      %v528 = vmax.f32 %v513, %v517
      %v529 = vmax.f32 %v527, %v528
      %v530 = vrot.slane %v529, 4
      %v531 = vmax.f32 %v529, %v530
      %v532 = vrot.slane %v531, 2
      %v533 = vmax.f32 %v531, %v532
      %v534 = vrot.slane %v533, 1
      %v535 = vmax.f32 %v533, %v534
      %v536 = vadd.f32 %v510, %v512
      %v537 = vadd.f32 %v536, %v514
      %v538 = vadd.f32 %v537, %v516
      %v539 = vrot.slane %v538, 4
      %v540 = vadd.f32 %v538, %v539
      %v541 = vrot.slane %v540, 2
      %v542 = vadd.f32 %v540, %v541
      %v543 = vrot.slane %v542, 1
      %v544 = vadd.f32 %v542, %v543
      %v545 = vadd.f32 %v511, %v513
      %v546 = vadd.f32 %v545, %v515
      %v547 = vadd.f32 %v546, %v517
      %v548 = vrot.slane %v547, 4
      %v549 = vadd.f32 %v547, %v548
      %v550 = vrot.slane %v549, 2
      %v551 = vadd.f32 %v549, %v550
      %v552 = vrot.slane %v551, 1
      %v553 = vadd.f32 %v551, %v552
      %v554 = vmul.f32 %v544, 0.03125
      %v555 = vmul.f32 %v553, 0.03125
      %556 = vset.pattern.permute.xlu0 1
      %557 = vperm.xlu0 %556, %v444
      %v558 = vpop.permute.xlu0 %557
      %560 = vset.pattern.permute.xlu0 1
      %561 = vperm.xlu0 %560, %v459
      %v562 = vpop.permute.xlu0 %561
      %564 = vset.pattern.permute.xlu0 1
      %565 = vperm.xlu0 %564, %v474
      %v566 = vpop.permute.xlu0 %565
      %568 = vset.pattern.permute.xlu0 1
      %569 = vperm.xlu0 %568, %v489
      %v570 = vpop.permute.xlu0 %569
      %v572 = vmul.f32 %v243, %v558
      %v573 = vmul.f32 %v244, %v558
      %v574 = vmul.f32 %v245, %v562
      %v575 = vmul.f32 %v246, %v562
      %v576 = vmul.f32 %v247, %v566
      %v577 = vmul.f32 %v248, %v566
      %v578 = vmul.f32 %v249, %v570
      %v579 = vmul.f32 %v250, %v570
      %v580 = vmax.f32 %v572, %v576
      %v581 = vmax.f32 %v574, %v578
      %v582 = vmax.f32 %v580, %v581
      %v583 = vrot.slane %v582, 4
      %v584 = vmax.f32 %v582, %v583
      %v585 = vrot.slane %v584, 2
      %v586 = vmax.f32 %v584, %v585
      %v587 = vrot.slane %v586, 1
      %v588 = vmax.f32 %v586, %v587
      %v589 = vmax.f32 %v573, %v577
      %v590 = vmax.f32 %v575, %v579
      %v591 = vmax.f32 %v589, %v590
      %v592 = vrot.slane %v591, 4
      %v593 = vmax.f32 %v591, %v592
      %v594 = vrot.slane %v593, 2
      %v595 = vmax.f32 %v593, %v594
      %v596 = vrot.slane %v595, 1
      %v597 = vmax.f32 %v595, %v596
      %v598 = vadd.f32 %v572, %v574
      %v599 = vadd.f32 %v598, %v576
      %v600 = vadd.f32 %v599, %v578
      %v601 = vrot.slane %v600, 4
      %v602 = vadd.f32 %v600, %v601
      %v603 = vrot.slane %v602, 2
      %v604 = vadd.f32 %v602, %v603
      %v605 = vrot.slane %v604, 1
      %v606 = vadd.f32 %v604, %v605
      %v607 = vadd.f32 %v573, %v575
      %v608 = vadd.f32 %v607, %v577
      %v609 = vadd.f32 %v608, %v579
      %v610 = vrot.slane %v609, 4
      %v611 = vadd.f32 %v609, %v610
      %v612 = vrot.slane %v611, 2
      %v613 = vadd.f32 %v611, %v612
      %v614 = vrot.slane %v613, 1
      %v615 = vadd.f32 %v613, %v614
      %v616 = vmul.f32 %v606, 0.03125
      %v617 = vmul.f32 %v615, 0.03125
      %v622 = vrot.slane %v588, 7
      %v623 = vrot.slane %v597, 7
      %v624 = vrot.slane %v616, 7
      %v625 = vrot.slane %v617, 7
      %vm630 = vcmask 1040384
      %v631 = vsel %vm630, %v526, %v622
      %v632 = vsel %vm630, %v535, %v623
      %v633 = vsel %vm630, %v554, %v624
      %v634 = vsel %vm630, %v555, %v625
      %v635 = vld [vmem:[%s3] sm:$0xff]
      %v636 = vld [vmem:[%s3 + $0x8] sm:$0xff]
      %v637 = vld [vmem:[%s3 + $0x10] sm:$0xff]
      %v638 = vld [vmem:[%s3 + $0x18] sm:$0xff]
      %v639 = vld [vmem:[%s3 + $0x20] sm:$0xff]
      %v640 = vld [vmem:[%s3 + $0x28] sm:$0xff]
      %v641 = vld [vmem:[%s3 + $0x30] sm:$0xff]
      %v642 = vld [vmem:[%s3 + $0x38] sm:$0xff]
      %v643 = vld [vmem:[%s3 + $0x40] sm:$0xff]
      %v644 = vld [vmem:[%s3 + $0x48] sm:$0xff]
      %v645 = vld [vmem:[%s3 + $0x50] sm:$0xff]
      %v646 = vld [vmem:[%s3 + $0x58] sm:$0xff]
      %v647 = vld [vmem:[%s3 + $0x60] sm:$0xff]
      %v648 = vld [vmem:[%s3 + $0x68] sm:$0xff]
      %v649 = vld [vmem:[%s3 + $0x70] sm:$0xff]
      %v650 = vld [vmem:[%s3 + $0x78] sm:$0xff]
      %v651 = vld [vmem:[%s3 + $0x80] sm:$0xff]
      %v652 = vld [vmem:[%s3 + $0x88] sm:$0xff]
      %v653 = vld [vmem:[%s3 + $0x90] sm:$0xff]
      %v654 = vld [vmem:[%s3 + $0x98] sm:$0xff]
      %v655 = vld [vmem:[%s3 + $0xa0] sm:$0xff]
      %v656 = vld [vmem:[%s3 + $0xa8] sm:$0xff]
      %v657 = vld [vmem:[%s3 + $0xb0] sm:$0xff]
      %v658 = vld [vmem:[%s3 + $0xb8] sm:$0xff]
      %v659 = vld [vmem:[%s3 + $0xc0] sm:$0xff]
      %v660 = vld [vmem:[%s3 + $0xc8] sm:$0xff]
      %v661 = vld [vmem:[%s3 + $0xd0] sm:$0xff]
      %v662 = vld [vmem:[%s3 + $0xd8] sm:$0xff]
      %v663 = vld [vmem:[%s3 + $0xe0] sm:$0xff]
      %v664 = vld [vmem:[%s3 + $0xe8] sm:$0xff]
      %v665 = vld [vmem:[%s3 + $0xf0] sm:$0xff]
      %v666 = vld [vmem:[%s3 + $0xf8] sm:$0xff]
      %v667 = vld [vmem:[%s3 + $0x100] sm:$0xff]
      %v668 = vld [vmem:[%s3 + $0x108] sm:$0xff]
      %v669 = vld [vmem:[%s3 + $0x110] sm:$0xff]
      %v670 = vld [vmem:[%s3 + $0x118] sm:$0xff]
      %v671 = vld [vmem:[%s3 + $0x120] sm:$0xff]
      %v672 = vld [vmem:[%s3 + $0x128] sm:$0xff]
      %v673 = vld [vmem:[%s3 + $0x130] sm:$0xff]
      %v674 = vld [vmem:[%s3 + $0x138] sm:$0xff]
      %v675 = vld [vmem:[%s3 + $0x140] sm:$0xff]
      %v676 = vld [vmem:[%s3 + $0x148] sm:$0xff]
      %v677 = vld [vmem:[%s3 + $0x150] sm:$0xff]
      %v678 = vld [vmem:[%s3 + $0x158] sm:$0xff]
      %v679 = vld [vmem:[%s3 + $0x160] sm:$0xff]
      %v680 = vld [vmem:[%s3 + $0x168] sm:$0xff]
      %v681 = vld [vmem:[%s3 + $0x170] sm:$0xff]
      %v682 = vld [vmem:[%s3 + $0x178] sm:$0xff]
      %v683 = vld [vmem:[%s3 + $0x180] sm:$0xff]
      %v684 = vld [vmem:[%s3 + $0x188] sm:$0xff]
      %v685 = vld [vmem:[%s3 + $0x190] sm:$0xff]
      %v686 = vld [vmem:[%s3 + $0x198] sm:$0xff]
      %v687 = vld [vmem:[%s3 + $0x1a0] sm:$0xff]
      %v688 = vld [vmem:[%s3 + $0x1a8] sm:$0xff]
      %v689 = vld [vmem:[%s3 + $0x1b0] sm:$0xff]
      %v690 = vld [vmem:[%s3 + $0x1b8] sm:$0xff]
      %v691 = vld [vmem:[%s3 + $0x1c0] sm:$0xff]
      %v692 = vld [vmem:[%s3 + $0x1c8] sm:$0xff]
      %v693 = vld [vmem:[%s3 + $0x1d0] sm:$0xff]
      %v694 = vld [vmem:[%s3 + $0x1d8] sm:$0xff]
      %v695 = vld [vmem:[%s3 + $0x1e0] sm:$0xff]
      %v696 = vld [vmem:[%s3 + $0x1e8] sm:$0xff]
      %v697 = vld [vmem:[%s3 + $0x1f0] sm:$0xff]
      %v698 = vld [vmem:[%s3 + $0x1f8] sm:$0xff]
      %v699 = vld [vmem:[%s3 + $0x200] sm:$0xff]
      %v700 = vld [vmem:[%s3 + $0x208] sm:$0xff]
      %v701 = vld [vmem:[%s3 + $0x210] sm:$0xff]
      %v702 = vld [vmem:[%s3 + $0x218] sm:$0xff]
      %v703 = vld [vmem:[%s3 + $0x220] sm:$0xff]
      %v704 = vld [vmem:[%s3 + $0x228] sm:$0xff]
      %v705 = vld [vmem:[%s3 + $0x230] sm:$0xff]
      %v706 = vld [vmem:[%s3 + $0x238] sm:$0xff]
      %v707 = vld [vmem:[%s3 + $0x240] sm:$0xff]
      %v708 = vld [vmem:[%s3 + $0x248] sm:$0xff]
      %v709 = vld [vmem:[%s3 + $0x250] sm:$0xff]
      %v710 = vld [vmem:[%s3 + $0x258] sm:$0xff]
      %v711 = vld [vmem:[%s3 + $0x260] sm:$0xff]
      %v712 = vld [vmem:[%s3 + $0x268] sm:$0xff]
      %v713 = vld [vmem:[%s3 + $0x270] sm:$0xff]
      %v714 = vld [vmem:[%s3 + $0x278] sm:$0xff]
      %v715 = vld [vmem:[%s3 + $0x280] sm:$0xff]
      %v716 = vld [vmem:[%s3 + $0x288] sm:$0xff]
      %v717 = vld [vmem:[%s3 + $0x290] sm:$0xff]
      %v718 = vld [vmem:[%s3 + $0x298] sm:$0xff]
      %v719 = vld [vmem:[%s3 + $0x2a0] sm:$0xff]
      %v720 = vld [vmem:[%s3 + $0x2a8] sm:$0xff]
      %v721 = vld [vmem:[%s3 + $0x2b0] sm:$0xff]
      %v722 = vld [vmem:[%s3 + $0x2b8] sm:$0xff]
      %v723 = vld [vmem:[%s3 + $0x2c0] sm:$0xff]
      %v724 = vld [vmem:[%s3 + $0x2c8] sm:$0xff]
      %v725 = vld [vmem:[%s3 + $0x2d0] sm:$0xff]
      %v726 = vld [vmem:[%s3 + $0x2d8] sm:$0xff]
      %v727 = vld [vmem:[%s3 + $0x2e0] sm:$0xff]
      %v728 = vld [vmem:[%s3 + $0x2e8] sm:$0xff]
      %v729 = vld [vmem:[%s3 + $0x2f0] sm:$0xff]
      %v730 = vld [vmem:[%s3 + $0x2f8] sm:$0xff]
      %v731 = vld [vmem:[%s3 + $0x300] sm:$0xff]
      %v732 = vld [vmem:[%s3 + $0x308] sm:$0xff]
      %v733 = vld [vmem:[%s3 + $0x310] sm:$0xff]
      %v734 = vld [vmem:[%s3 + $0x318] sm:$0xff]
      %v735 = vld [vmem:[%s3 + $0x320] sm:$0xff]
      %v736 = vld [vmem:[%s3 + $0x328] sm:$0xff]
      %v737 = vld [vmem:[%s3 + $0x330] sm:$0xff]
      %v738 = vld [vmem:[%s3 + $0x338] sm:$0xff]
      %v739 = vld [vmem:[%s3 + $0x340] sm:$0xff]
      %v740 = vld [vmem:[%s3 + $0x348] sm:$0xff]
      %v741 = vld [vmem:[%s3 + $0x350] sm:$0xff]
      %v742 = vld [vmem:[%s3 + $0x358] sm:$0xff]
      %v743 = vld [vmem:[%s3 + $0x360] sm:$0xff]
      %v744 = vld [vmem:[%s3 + $0x368] sm:$0xff]
      %v745 = vld [vmem:[%s3 + $0x370] sm:$0xff]
      %v746 = vld [vmem:[%s3 + $0x378] sm:$0xff]
      %v747 = vld [vmem:[%s3 + $0x380] sm:$0xff]
      %v748 = vld [vmem:[%s3 + $0x388] sm:$0xff]
      %v749 = vld [vmem:[%s3 + $0x390] sm:$0xff]
      %v750 = vld [vmem:[%s3 + $0x398] sm:$0xff]
      %v751 = vld [vmem:[%s3 + $0x3a0] sm:$0xff]
      %v752 = vld [vmem:[%s3 + $0x3a8] sm:$0xff]
      %v753 = vld [vmem:[%s3 + $0x3b0] sm:$0xff]
      %v754 = vld [vmem:[%s3 + $0x3b8] sm:$0xff]
      %v755 = vld [vmem:[%s3 + $0x3c0] sm:$0xff]
      %v756 = vld [vmem:[%s3 + $0x3c8] sm:$0xff]
      %v757 = vld [vmem:[%s3 + $0x3d0] sm:$0xff]
      %v758 = vld [vmem:[%s3 + $0x3d8] sm:$0xff]
      %v759 = vld [vmem:[%s3 + $0x3e0] sm:$0xff]
      %v760 = vld [vmem:[%s3 + $0x3e8] sm:$0xff]
      %v761 = vld [vmem:[%s3 + $0x3f0] sm:$0xff]
      %v762 = vld [vmem:[%s3 + $0x3f8] sm:$0xff]
      %s763 = sld [smem:[#allocation2]]
      %v764 = vstv %s763
      %765 = vmatpush.msra.mxu0 %v665
      %766 = vmatpush.msra.mxu0 %v663
      %767 = vmatpush.msra.mxu0 %v661
      %768 = vmatpush.msra.mxu0 %v659
      %769 = vmatpush.msra.mxu0 %v657
      %770 = vmatpush.msra.mxu0 %v655
      %771 = vmatpush.msra.mxu0 %v653
      %772 = vmatpush.msra.mxu0 %v651
      %773 = vmatpush.msra.mxu0 %v649
      %774 = vmatpush.msra.mxu0 %v647
      %775 = vmatpush.msra.mxu0 %v645
      %776 = vmatpush.msra.mxu0 %v643
      %777 = vmatpush.msra.mxu0 %v641
      %778 = vmatpush.msra.mxu0 %v639
      %779 = vmatpush.msra.mxu0 %v637
      %780 = vmatpush.msra.mxu0 %v635
      %781 = vmatmul.f32.gmra.mxu0 %v631
      %v782 = vpop.f32.mrf.mxu0
      %v783 = vadd.f32 %v764, %v782
      %784 = vdwg.mxu0
      %785 = vmatpush.msra.mxu0 %v697
      %786 = vmatpush.msra.mxu0 %v695
      %787 = vmatpush.msra.mxu0 %v693
      %788 = vmatpush.msra.mxu0 %v691
      %789 = vmatpush.msra.mxu0 %v689
      %790 = vmatpush.msra.mxu0 %v687
      %791 = vmatpush.msra.mxu0 %v685
      %792 = vmatpush.msra.mxu0 %v683
      %793 = vmatpush.msra.mxu0 %v681
      %794 = vmatpush.msra.mxu0 %v679
      %795 = vmatpush.msra.mxu0 %v677
      %796 = vmatpush.msra.mxu0 %v675
      %797 = vmatpush.msra.mxu0 %v673
      %798 = vmatpush.msra.mxu0 %v671
      %799 = vmatpush.msra.mxu0 %v669
      %800 = vmatpush.msra.mxu0 %v667
      %801 = vmatmul.f32.gmra.mxu0 %v632
      %v802 = vpop.f32.mrf.mxu0
      %v803 = vadd.f32 %v783, %v802
      %804 = vdwg.mxu0
      %805 = vmatpush.msra.mxu0 %v729
      %806 = vmatpush.msra.mxu0 %v727
      %807 = vmatpush.msra.mxu0 %v725
      %808 = vmatpush.msra.mxu0 %v723
      %809 = vmatpush.msra.mxu0 %v721
      %810 = vmatpush.msra.mxu0 %v719
      %811 = vmatpush.msra.mxu0 %v717
      %812 = vmatpush.msra.mxu0 %v715
      %813 = vmatpush.msra.mxu0 %v713
      %814 = vmatpush.msra.mxu0 %v711
      %815 = vmatpush.msra.mxu0 %v709
      %816 = vmatpush.msra.mxu0 %v707
      %817 = vmatpush.msra.mxu0 %v705
      %818 = vmatpush.msra.mxu0 %v703
      %819 = vmatpush.msra.mxu0 %v701
      %820 = vmatpush.msra.mxu0 %v699
      %821 = vmatmul.f32.gmra.mxu0 %v633
      %v822 = vpop.f32.mrf.mxu0
      %v823 = vadd.f32 %v803, %v822
      %824 = vdwg.mxu0
      %825 = vmatpush.msra.mxu0 %v761
      %826 = vmatpush.msra.mxu0 %v759
      %827 = vmatpush.msra.mxu0 %v757
      %828 = vmatpush.msra.mxu0 %v755
      %829 = vmatpush.msra.mxu0 %v753
      %830 = vmatpush.msra.mxu0 %v751
      %831 = vmatpush.msra.mxu0 %v749
      %832 = vmatpush.msra.mxu0 %v747
      %833 = vmatpush.msra.mxu0 %v745
      %834 = vmatpush.msra.mxu0 %v743
      %835 = vmatpush.msra.mxu0 %v741
      %836 = vmatpush.msra.mxu0 %v739
      %837 = vmatpush.msra.mxu0 %v737
      %838 = vmatpush.msra.mxu0 %v735
      %839 = vmatpush.msra.mxu0 %v733
      %840 = vmatpush.msra.mxu0 %v731
      %841 = vmatmul.f32.gmra.mxu0 %v634
      %v842 = vpop.f32.mrf.mxu0
      %v843 = vadd.f32 %v823, %v842
      %844 = vdwg.mxu0
      %845 = vmatpush.msra.mxu0 %v666
      %846 = vmatpush.msra.mxu0 %v664
      %847 = vmatpush.msra.mxu0 %v662
      %848 = vmatpush.msra.mxu0 %v660
      %849 = vmatpush.msra.mxu0 %v658
      %850 = vmatpush.msra.mxu0 %v656
      %851 = vmatpush.msra.mxu0 %v654
      %852 = vmatpush.msra.mxu0 %v652
      %853 = vmatpush.msra.mxu0 %v650
      %854 = vmatpush.msra.mxu0 %v648
      %855 = vmatpush.msra.mxu0 %v646
      %856 = vmatpush.msra.mxu0 %v644
      %857 = vmatpush.msra.mxu0 %v642
      %858 = vmatpush.msra.mxu0 %v640
      %859 = vmatpush.msra.mxu0 %v638
      %860 = vmatpush.msra.mxu0 %v636
      %861 = vmatmul.f32.gmra.mxu0 %v631
      %v862 = vpop.f32.mrf.mxu0
      %v863 = vadd.f32 %v764, %v862
      %864 = vdwg.mxu0
      %865 = vmatpush.msra.mxu0 %v698
      %866 = vmatpush.msra.mxu0 %v696
      %867 = vmatpush.msra.mxu0 %v694
      %868 = vmatpush.msra.mxu0 %v692
      %869 = vmatpush.msra.mxu0 %v690
      %870 = vmatpush.msra.mxu0 %v688
      %871 = vmatpush.msra.mxu0 %v686
      %872 = vmatpush.msra.mxu0 %v684
      %873 = vmatpush.msra.mxu0 %v682
      %874 = vmatpush.msra.mxu0 %v680
      %875 = vmatpush.msra.mxu0 %v678
      %876 = vmatpush.msra.mxu0 %v676
      %877 = vmatpush.msra.mxu0 %v674
      %878 = vmatpush.msra.mxu0 %v672
      %879 = vmatpush.msra.mxu0 %v670
      %880 = vmatpush.msra.mxu0 %v668
      %881 = vmatmul.f32.gmra.mxu0 %v632
      %v882 = vpop.f32.mrf.mxu0
      %v883 = vadd.f32 %v863, %v882
      %884 = vdwg.mxu0
      %885 = vmatpush.msra.mxu0 %v730
      %886 = vmatpush.msra.mxu0 %v728
      %887 = vmatpush.msra.mxu0 %v726
      %888 = vmatpush.msra.mxu0 %v724
      %889 = vmatpush.msra.mxu0 %v722
      %890 = vmatpush.msra.mxu0 %v720
      %891 = vmatpush.msra.mxu0 %v718
      %892 = vmatpush.msra.mxu0 %v716
      %893 = vmatpush.msra.mxu0 %v714
      %894 = vmatpush.msra.mxu0 %v712
      %895 = vmatpush.msra.mxu0 %v710
      %896 = vmatpush.msra.mxu0 %v708
      %897 = vmatpush.msra.mxu0 %v706
      %898 = vmatpush.msra.mxu0 %v704
      %899 = vmatpush.msra.mxu0 %v702
      %900 = vmatpush.msra.mxu0 %v700
      %901 = vmatmul.f32.gmra.mxu0 %v633
      %v902 = vpop.f32.mrf.mxu0
      %v903 = vadd.f32 %v883, %v902
      %904 = vdwg.mxu0
      %905 = vmatpush.msra.mxu0 %v762
      %906 = vmatpush.msra.mxu0 %v760
      %907 = vmatpush.msra.mxu0 %v758
      %908 = vmatpush.msra.mxu0 %v756
      %909 = vmatpush.msra.mxu0 %v754
      %910 = vmatpush.msra.mxu0 %v752
      %911 = vmatpush.msra.mxu0 %v750
      %912 = vmatpush.msra.mxu0 %v748
      %913 = vmatpush.msra.mxu0 %v746
      %914 = vmatpush.msra.mxu0 %v744
      %915 = vmatpush.msra.mxu0 %v742
      %916 = vmatpush.msra.mxu0 %v740
      %917 = vmatpush.msra.mxu0 %v738
      %918 = vmatpush.msra.mxu0 %v736
      %919 = vmatpush.msra.mxu0 %v734
      %920 = vmatpush.msra.mxu0 %v732
      %921 = vmatmul.f32.gmra.mxu0 %v634
      %v922 = vpop.f32.mrf.mxu0
      %v923 = vadd.f32 %v903, %v922
      %924 = vdwg.mxu0
      %v925 = vxor.u32 %v843, 2147483648
      %v926 = vxor.u32 %v923, 2147483648
      %v927 = vmul.f32 %v925, 1.442695
      %v928 = vpow.pop %v927
      %v929 = vmul.f32 %v926, 1.442695
      %v930 = vpow.pop %v929
      %v931 = vadd.f32 %v928, 1.0
      %v932 = vadd.f32 %v930, 1.0
      %v933 = vrcp.pop %v931
      %v934 = vmul.f32 %v931, %v933
      %v935 = vsub.f32 1.0, %v934
      %v936 = vmul.f32 %v933, %v935
      %v937 = vadd.f32 %v933, %v936
      %vm938 = vweird.f32 %v931
      %vm939 = vweird.f32 %v933
      %vm940 = vmor %vm938, %vm939
      %v941 = vsel %vm940, %v933, %v937
      %v942 = vand.u32 2147483647, %v931
      %vm943 = vcmp.eq.f32.partialorder %v942, 8.507059e+37
      %v944 = vand.u32 %v931, 2147483648
      %v945 = vor.u32 1.1754944e-38, %v944
      %v946 = vsel %vm943, %v945, %v941
      %v947 = vmul.f32 1.0, %v946
      %v948 = vrcp.pop %v932
      %v949 = vmul.f32 %v932, %v948
      %v950 = vsub.f32 1.0, %v949
      %v951 = vmul.f32 %v948, %v950
      %v952 = vadd.f32 %v948, %v951
      %vm953 = vweird.f32 %v932
      %vm954 = vweird.f32 %v948
      %vm955 = vmor %vm953, %vm954
      %v956 = vsel %vm955, %v948, %v952
      %v957 = vand.u32 2147483647, %v932
      %vm958 = vcmp.eq.f32.partialorder %v957, 8.507059e+37
      %v959 = vand.u32 %v932, 2147483648
      %v960 = vor.u32 1.1754944e-38, %v959
      %v961 = vsel %vm958, %v960, %v956
      %v962 = vmul.f32 1.0, %v961
      %v963 = vperm.slane %v947, 0
      %v964 = vperm.slane %v962, 0
      %v965 = vmul.f32 %v493, %v963
      %v966 = vmul.f32 %v493, %v964
      %v967 = vmul.f32 %v498, %v963
      %v968 = vmul.f32 %v498, %v964
      %v969 = vmul.f32 %v503, %v963
      %v970 = vmul.f32 %v503, %v964
      %v971 = vmul.f32 %v508, %v963
      %v972 = vmul.f32 %v508, %v964
      %v973 = vadd.f32 %v965, 1.0
      %v974 = vadd.f32 %v966, 1.0
      %v975 = vadd.f32 %v967, 1.0
      %v976 = vadd.f32 %v968, 1.0
      %v977 = vadd.f32 %v969, 1.0
      %v978 = vadd.f32 %v970, 1.0
      %v979 = vadd.f32 %v971, 1.0
      %v980 = vadd.f32 %v972, 1.0
      %v981 = vmul.f32 %v234, %v973
      %v982 = vmul.f32 %v235, %v974
      %v983 = vmul.f32 %v236, %v975
      %v984 = vmul.f32 %v237, %v976
      %v985 = vmul.f32 %v238, %v977
      %v986 = vmul.f32 %v239, %v978
      %v987 = vmul.f32 %v240, %v979
      %v988 = vmul.f32 %v241, %v980
      %989 = vst [vmem:[%s232] sm:$0xff] %v981
      %990 = vst [vmem:[%s232 + $0x8] sm:$0xff] %v982
      %991 = vst [vmem:[%s232 + $0x10] sm:$0xff] %v983
      %992 = vst [vmem:[%s232 + $0x18] sm:$0xff] %v984
      %993 = vst [vmem:[%s232 + $0x20] sm:$0xff] %v985
      %994 = vst [vmem:[%s232 + $0x28] sm:$0xff] %v986
      %995 = vst [vmem:[%s232 + $0x30] sm:$0xff] %v987
      %996 = vst [vmem:[%s232 + $0x38] sm:$0xff] %v988
      %v997 = vperm.slane %v947, 1
      %v998 = vperm.slane %v962, 1
      %v999 = vmul.f32 %v558, %v997
      %v1000 = vmul.f32 %v558, %v998
      %v1001 = vmul.f32 %v562, %v997
      %v1002 = vmul.f32 %v562, %v998
      %v1003 = vmul.f32 %v566, %v997
      %v1004 = vmul.f32 %v566, %v998
      %v1005 = vmul.f32 %v570, %v997
      %v1006 = vmul.f32 %v570, %v998
      %v1007 = vadd.f32 %v999, 1.0
      %v1008 = vadd.f32 %v1000, 1.0
      %v1009 = vadd.f32 %v1001, 1.0
      %v1010 = vadd.f32 %v1002, 1.0
      %v1011 = vadd.f32 %v1003, 1.0
      %v1012 = vadd.f32 %v1004, 1.0
      %v1013 = vadd.f32 %v1005, 1.0
      %v1014 = vadd.f32 %v1006, 1.0
      %v1015 = vmul.f32 %v243, %v1007
      %v1016 = vmul.f32 %v244, %v1008
      %v1017 = vmul.f32 %v245, %v1009
      %v1018 = vmul.f32 %v246, %v1010
      %v1019 = vmul.f32 %v247, %v1011
      %v1020 = vmul.f32 %v248, %v1012
      %v1021 = vmul.f32 %v249, %v1013
      %v1022 = vmul.f32 %v250, %v1014
      %s1023 = scalar_lea.vmem %s232, 64
      %1024 = vst [vmem:[%s1023] sm:$0xff] %v1015
      %1025 = vst [vmem:[%s1023 + $0x8] sm:$0xff] %v1016
      %1026 = vst [vmem:[%s1023 + $0x10] sm:$0xff] %v1017
      %1027 = vst [vmem:[%s1023 + $0x18] sm:$0xff] %v1018
      %1028 = vst [vmem:[%s1023 + $0x20] sm:$0xff] %v1019
      %1029 = vst [vmem:[%s1023 + $0x28] sm:$0xff] %v1020
      %1030 = vst [vmem:[%s1023 + $0x30] sm:$0xff] %v1021
      %1031 = vst [vmem:[%s1023 + $0x38] sm:$0xff] %v1022
      %s1032 = smul.u32 2, %s17
      %p1033 = scmp.lt.s32.totalorder %s1032, 7
      %s1034 = scalar_select %p1033, %s1032, 7
      %s1035 = smul.addr %s1034, 8
      %s1036 = smul.addr %s1035, 8
      %s1037 = scalar_lea.vmem %s5, %s1036
      // Predicated region
      $region41: #{cbam_forward.1} parent=39 // pred_check
        %p1038 = pneg %p145
      $region42: #{cbam_forward.1} parent=39 // pred_check_branch
        %1040 = sbr.rel (%p1038) target = $region44
      $region43: #{cbam_forward.1} parent=39 // pred_region
        %s1041 = smul.u32 2, %s17
      $region44: #{cbam_forward.1} parent=39 // pred_fallthru
        _
    $region40: #{cbam_forward.1} parent=5 // pred_fallthru
      _
    %p1042 = scmp.le.s32.totalorder 2, %s12
    // Predicated region
    $region45: #{cbam_forward.1} parent=5 // pred_check
      %p1043 = pneg %p1042
    $region46: #{cbam_forward.1} parent=5 // pred_check_branch
      %1045 = sbr.rel (%p1043) target = $region48
    $region47: #{cbam_forward.1} parent=5 // pred_region
      %s1046 = ssub.s32 %s12, 2
      // Predicated region
      $region49: #{cbam_forward.1} parent=47 // pred_check
        %p1047 = pneg %p151
      $region50: #{cbam_forward.1} parent=47 // pred_check_branch
        %1049 = sbr.rel (%p1047) target = $region52
      $region51: #{cbam_forward.1} parent=47 // pred_region
        %s1050 = smul.u32 2, %s18
        %p1051 = scmp.lt.s32.totalorder %s1050, 7
        %s1052 = scalar_select %p1051, %s1050, 7
        %s1053 = smul.addr %s1052, 8
        %s1054 = smul.addr %s1053, 8
        %s1055 = scalar_lea.vmem %s5, %s1054
      $region52: #{cbam_forward.1} parent=47 // pred_fallthru
        _
    $region48: #{cbam_forward.1} parent=5 // pred_fallthru
      _
  $region6: #{cbam_forward.1} parent=0 // loop_footer
    %s16 = sadd.s32 1, %s12
  $region7: #{cbam_forward.1} parent=0 // loop_footer_branch
    %11 = sbr.rel target = $region3
  $region8: #{cbam_forward.1} parent=0 // loop_exit
    _

</llo_original>
